<compile_context>
chip_gen: v7x
topology: tpu7x:2x2x1
jax: 0.10.0
libtpu: 0.0.40
codegen_flags: <defaults>
</compile_context>

<pallas_src>
import functools

import jax
import jax.numpy as jnp
from jax import lax
from jax.experimental import pallas as pl
from jax.experimental.pallas import tpu as pltpu

K = 3          # conv kernel size
PAD = 1        # conv padding
LEAK = 0.2     # LeakyReLU negative slope
EPS = 1e-8     # PixelNorm epsilon


def _conv_kernel(x_ref, w_ref, b_ref, o_ref, *,
                 W, tile_h, C_out, stack_taps, mask_on_output):
    # x_ref : (1, 1, C_in, (tile_h + 2*PAD) * W)  halo'd row tile (MXU dtype)
    # w_ref : stacked  -> (C_out, K*K*C_in)       (MXU dtype)
    #         per-tap  -> (K*K, C_out, C_in)      (MXU dtype)
    # b_ref : (C_out, 1)                          f32 conv bias
    # o_ref : (1, C_out, tile_h * W)              lane-dense output tile
    L = tile_h * W

    # Lane -> image-column map.  Modulo W keeps it correct under row tiling.
    col = lax.broadcasted_iota(jnp.int32, (1, L), 1) % W

    def tap_window(ky, kx):
        """(C_in, L) input window for tap (ky, kx).

        dy is handled by a static slice into the halo'd slab (zero rows from
        the HBM row padding give conv zero-padding for free); dx is a lane
        roll whose cross-column wrap is masked by `valid`.
        """
        dy, dx = ky - PAD, kx - PAD
        base = (PAD + dy) * W
        win = x_ref[0, 0, :, base:base + L]            # static slice
        valid = None
        if dx != 0:
            win = pltpu.roll(win, shift=(-dx) % L, axis=1)   # XLU lane rotate
            valid = (col >= -dx) if dx < 0 else (col < W - dx)
        return win, valid

    if stack_taps:
        # Small C_in: stack all 9 taps on the contraction dim -> one MXU matmul.
        slabs = []
        for ky in range(K):
            for kx in range(K):
                win, valid = tap_window(ky, kx)
                if valid is not None:
                    win = jnp.where(valid, win, jnp.zeros_like(win))
                slabs.append(win)
        xs = jnp.concatenate(slabs, axis=0)            # (K*K*C_in, L)
        acc = jnp.dot(w_ref[...], xs,
                      preferred_element_type=jnp.float32)    # (C_out, L) f32
    else:
        acc = jnp.zeros((C_out, L), dtype=jnp.float32)
        for ky in range(K):
            for kx in range(K):
                win, valid = tap_window(ky, kx)
                if valid is not None and not mask_on_output:
                    win = jnp.where(valid, win, jnp.zeros_like(win))
                part = jnp.dot(w_ref[ky * K + kx], win,
                               preferred_element_type=jnp.float32)
                if valid is not None and mask_on_output:
                    part = jnp.where(valid, part, 0.0)
                acc = acc + part                        # value chain -> MRB on v7x

    y = acc + b_ref[...]                                # bias (C_out,1) bcast, f32

    # PixelNorm over the channel dim (sublane reduction over C_out rows).
    ms = jnp.mean(y * y, axis=0, keepdims=True)         # (1, L)
    y = y * lax.rsqrt(ms + EPS)                          # EUP rsqrt

    # LeakyReLU(0.2).
    y = jnp.where(y >= 0.0, y, LEAK * y)

    o_ref[0] = y.astype(o_ref.dtype)


def _footprint_bytes(tile_h, W, C_in, C_out, in_item, out_item, stack_taps):
    """Rough VMEM footprint of one grid step (double-buffered blocks + temps)."""
    L = tile_h * W
    halo = (tile_h + 2 * PAD) * W
    b = 0
    b += 2 * C_in * halo * in_item                # double-buffered x tile
    b += 2 * C_out * L * out_item                 # double-buffered out tile
    b += 2 * K * K * C_out * C_in * in_item       # resident weights (2 copies, worst case)
    if stack_taps:
        b += K * K * C_in * L * in_item           # stacked-tap slab
    b += 2 * C_in * L * in_item                   # shifted-window temporaries
    b += 3 * C_out * L * 4                        # f32 acc + epilogue temporaries
    return b


def _pick_tile_h(H, W, C_in, C_out, in_item, out_item, stack_taps, budget_bytes):
    cands = [d for d in range(1, H + 1)
             if H % d == 0 and (d == H or (d * W) % 128 == 0)]
    cands.sort(reverse=True)
    for th in cands:
        if _footprint_bytes(th, W, C_in, C_out, in_item, out_item,
                            stack_taps) <= budget_bytes:
            return th
    return cands[-1]     # best effort (smallest lane-dense tile)


def conv_pixelnorm_lrelu(x_nchw, weight_oihw, bias, *,
                         mxu_dtype=jnp.bfloat16, tile_h=None, stack_taps=None,
                         vmem_budget_bytes=40 * 1024 * 1024):
    """_Conv forward (conv3x3 pad1 + bias -> PixelNorm -> LeakyReLU(0.2)).

    x_nchw:      (B, C_in, H, W)
    weight_oihw: (C_out, C_in, K, K)   (PyTorch Conv2d layout)
    bias:        (C_out,)
    returns:     (B, C_out, H, W), dtype of x
    """
    B, C_in, H, W = x_nchw.shape
    C_out = weight_oihw.shape[0]
    out_dtype = x_nchw.dtype

    if stack_taps is None:
        stack_taps = C_in <= 64                    # stacked contraction only pays for small C_in
    mask_on_output = (not stack_taps) and (C_out < C_in)

    in_item = jnp.dtype(mxu_dtype).itemsize
    out_item = jnp.dtype(out_dtype).itemsize
    if tile_h is None:
        tile_h = _pick_tile_h(H, W, C_in, C_out, in_item, out_item,
                              stack_taps, vmem_budget_bytes)
    assert H % tile_h == 0
    assert tile_h == H or (tile_h * W) % 128 == 0
    nt = H // tile_h
    L = tile_h * W
    halo_lanes = (tile_h + 2 * PAD) * W

    # --- HBM-side layout plumbing (cheap relative to the conv) ----------------
    # Row-pad once, then materialize halo-duplicated row tiles so every grid
    # step reads a plain rectangular block.
    x_pad = jnp.pad(x_nchw, ((0, 0), (0, 0), (PAD, PAD), (0, 0)))
    if nt == 1:
        x_tiles = x_pad[:, None]
    else:
        x_tiles = jnp.stack(
            [x_pad[:, :, t * tile_h:t * tile_h + tile_h + 2 * PAD, :]
             for t in range(nt)], axis=1)
    x_tiles = x_tiles.reshape(B, nt, C_in, halo_lanes).astype(mxu_dtype)

    if stack_taps:
        # (C_out, K*K*C_in), column order (ky, kx, ci) matching the in-kernel stack.
        w_arg = jnp.transpose(weight_oihw, (0, 2, 3, 1)).reshape(C_out, K * K * C_in)
        w_spec = pl.BlockSpec((C_out, K * K * C_in), lambda b, t: (0, 0))
    else:
        # Per-tap weight slabs: w[ky*K+kx, co, ci] = weight[co, ci, ky, kx].
        w_arg = jnp.transpose(weight_oihw, (2, 3, 0, 1)).reshape(K * K, C_out, C_in)
        w_spec = pl.BlockSpec((K * K, C_out, C_in), lambda b, t: (0, 0, 0))
    w_arg = w_arg.astype(mxu_dtype)
    b2d = bias.reshape(C_out, 1).astype(jnp.float32)

    kernel = functools.partial(
        _conv_kernel, W=W, tile_h=tile_h, C_out=C_out,
        stack_taps=stack_taps, mask_on_output=mask_on_output)

    footprint = _footprint_bytes(tile_h, W, C_in, C_out, in_item, out_item, stack_taps)
    vmem_limit = int(min(max(2 * footprint + (8 << 20), 32 << 20), 64 << 20))

    out_flat = pl.pallas_call(
        kernel,
        out_shape=jax.ShapeDtypeStruct((B, C_out, H * W), out_dtype),
        grid_spec=pltpu.PrefetchScalarGridSpec(
            num_scalar_prefetch=0,
            grid=(B, nt),                      # images x row-tiles, both parallel
            in_specs=[
                pl.BlockSpec((1, 1, C_in, halo_lanes), lambda b, t: (b, t, 0, 0)),
                w_spec,                                         # resident weights
                pl.BlockSpec((C_out, 1), lambda b, t: (0, 0)),  # resident bias
            ],
            # Output written straight into the (B, C_out, H*W) NCHW slab:
            # row-tile t covers lanes [t*L, (t+1)*L) -> no transpose afterwards.
            out_specs=pl.BlockSpec((1, C_out, L), lambda b, t: (b, 0, t)),
        ),
        compiler_params=pltpu.CompilerParams(
            dimension_semantics=("parallel", "parallel"),
            vmem_limit_bytes=vmem_limit,
        ),
    )(x_tiles, w_arg, b2d)

    # Free (contiguous) reshape — already NCHW-ordered.
    return out_flat.reshape(B, C_out, H, W)


def _reference(x_nchw, weight_oihw, bias):
    """Pure-JAX reference (lax conv + PixelNorm + LeakyReLU), all in NCHW."""
    y = lax.conv_general_dilated(
        x_nchw, weight_oihw,
        window_strides=(1, 1), padding=((PAD, PAD), (PAD, PAD)),
        dimension_numbers=("NCHW", "OIHW", "NCHW"),
    ) + bias[None, :, None, None]
    ms = jnp.mean(y * y, axis=1, keepdims=True)
    y = y * lax.rsqrt(ms + EPS)
    return jnp.where(y >= 0.0, y, LEAK * y)


if __name__ == "__main__":
    key = jax.random.PRNGKey(0)
    kx, kw, kb = jax.random.split(key, 3)

    B, C_in, H, W = 2, 4, 16, 16
    C_out = 8

    x = jax.random.normal(kx, (B, C_in, H, W), dtype=jnp.float32)
    fan_in = K * K * C_in
    weight = jax.random.normal(kw, (C_out, C_in, K, K), dtype=jnp.float32) * (2.0 / fan_in) ** 0.5
    bias = jax.random.normal(kb, (C_out,), dtype=jnp.float32) * 0.01

    ref = _reference(x, weight, bias)

    # 1) f32 MXU path, stacked taps, whole-image tile: tight check vs f32 reference.
    out_f32 = jax.block_until_ready(
        conv_pixelnorm_lrelu(x, weight, bias, mxu_dtype=jnp.float32))
    assert out_f32.shape == (B, C_out, H, W)
    assert jnp.allclose(out_f32, ref, atol=1e-4, rtol=1e-4)

    # 2) f32, forced row tiling (exercises the halo path, 2 row tiles).
    out_tiled = jax.block_until_ready(
        conv_pixelnorm_lrelu(x, weight, bias, mxu_dtype=jnp.float32, tile_h=8))
    assert jnp.allclose(out_tiled, ref, atol=1e-4, rtol=1e-4)

    # 3) f32, per-tap (non-stacked) MXU path.
    out_pertap = jax.block_until_ready(
        conv_pixelnorm_lrelu(x, weight, bias, mxu_dtype=jnp.float32, stack_taps=False))
    assert jnp.allclose(out_pertap, ref, atol=1e-4, rtol=1e-4)

    # 4) Default perf config: bf16 MXU inputs, f32 accumulation (loose sanity check).
    out_bf16 = jax.block_until_ready(conv_pixelnorm_lrelu(x, weight, bias))
    assert out_bf16.shape == (B, C_out, H, W)
    assert jnp.allclose(out_bf16, ref, atol=0.15, rtol=0.1)

    print("KERNEL_OK")
</pallas_src>

<mosaic_0001>
module attributes {stable_mosaic.version = 11 : i64} {
  func.func @_conv_kernel(%arg0: i32, %arg1: i32, %arg2: memref<1x1x4x288xf32, #tpu.memory_space<vmem>>, %arg3: memref<8x36xf32, #tpu.memory_space<vmem>>, %arg4: memref<8x1xf32, #tpu.memory_space<vmem>>, %arg5: memref<1x8x256xf32, #tpu.memory_space<vmem>>) attributes {dimension_semantics = [#tpu.dimension_semantics<parallel>, #tpu.dimension_semantics<parallel>], iteration_bounds = array<i64: 2, 1>, scalar_prefetch = 0 : i64, scratch_operands = 0 : i64, tpu.core_type = #tpu.core_type<tc>, window_params = [{transform_indices = @transform_0, window_bounds = array<i64: 1, 1, 4, 288>}, {pipeline_mode = #tpu.pipeline_mode<synchronous>, transform_indices = @transform_1, window_bounds = array<i64: 8, 36>}, {pipeline_mode = #tpu.pipeline_mode<synchronous>, transform_indices = @transform_2, window_bounds = array<i64: 8, 1>}, {transform_indices = @transform_3, window_bounds = array<i64: 1, 8, 256>}]} {
    %0 = tpu.iota {dimensions = array<i32: 1>} : vector<1x256xi32>
    %c16_i32 = arith.constant 16 : i32
    %c0_i32 = arith.constant 0 : i32
    %1 = arith.cmpi eq, %c16_i32, %c0_i32 : i32
    %c1_i32 = arith.constant 1 : i32
    %2 = arith.select %1, %c1_i32, %c16_i32 : i32
    %3 = vector.broadcast %2 : i32 to vector<1x256xi32>
    %4 = arith.remsi %0, %3 : vector<1x256xi32>
    %c0_i32_0 = arith.constant 0 : i32
    %5 = vector.broadcast %c0_i32_0 : i32 to vector<1x256xi32>
    %6 = arith.cmpi ne, %4, %5 : vector<1x256xi32>
    %c0_i32_1 = arith.constant 0 : i32
    %7 = vector.broadcast %c0_i32_1 : i32 to vector<1x256xi32>
    %8 = arith.cmpi slt, %4, %7 : vector<1x256xi32>
    %c0_i32_2 = arith.constant 0 : i32
    %9 = arith.cmpi slt, %2, %c0_i32_2 : i32
    %10 = vector.broadcast %9 : i1 to vector<1x256xi1>
    %11 = vector.broadcast %10 : vector<1x256xi1> to vector<1x256xi1>
    %12 = arith.xori %8, %11 : vector<1x256xi1>
    %13 = arith.andi %12, %6 : vector<1x256xi1>
    %14 = vector.broadcast %2 : i32 to vector<1x256xi32>
    %15 = arith.addi %4, %14 : vector<1x256xi32>
    %16 = arith.select %13, %15, %4 : vector<1x256xi1>, vector<1x256xi32>
    %c0 = arith.constant 0 : index
    %c0_3 = arith.constant 0 : index
    %c0_4 = arith.constant 0 : index
    %c0_5 = arith.constant 0 : index
    %17 = vector.load %arg2[%c0, %c0_3, %c0_4, %c0_5] : memref<1x1x4x288xf32, #tpu.memory_space<vmem>>, vector<1x1x4x256xf32>
    %18 = vector.shape_cast %17 : vector<1x1x4x256xf32> to vector<4x256xf32>
    %c1_i32_6 = arith.constant 1 : i32
    %19 = tpu.dynamic_rotate %18 by %c1_i32_6 dim 1 : vector<4x256xf32>, i32 -> vector<4x256xf32>
    %c1_i32_7 = arith.constant 1 : i32
    %20 = vector.broadcast %c1_i32_7 : i32 to vector<1x256xi32>
    %21 = arith.cmpi sge, %16, %20 : vector<1x256xi32>
    %cst = arith.constant 0.000000e+00 : f32
    %22 = vector.broadcast %cst : f32 to vector<4x256xf32>
    %23 = vector.shape_cast %21 : vector<1x256xi1> to vector<1x256xi1>
    %24 = vector.broadcast %23 : vector<1x256xi1> to vector<4x256xi1>
    %25 = arith.select %24, %19, %22 : vector<4x256xi1>, vector<4x256xf32>
    %c0_8 = arith.constant 0 : index
    %c0_9 = arith.constant 0 : index
    %c0_10 = arith.constant 0 : index
    %c0_11 = arith.constant 0 : index
    %26 = vector.load %arg2[%c0_8, %c0_9, %c0_10, %c0_11] : memref<1x1x4x288xf32, #tpu.memory_space<vmem>>, vector<1x1x4x256xf32>
    %27 = vector.shape_cast %26 : vector<1x1x4x256xf32> to vector<4x256xf32>
    %c0_12 = arith.constant 0 : index
    %c0_13 = arith.constant 0 : index
    %c0_14 = arith.constant 0 : index
    %c0_15 = arith.constant 0 : index
    %28 = vector.load %arg2[%c0_12, %c0_13, %c0_14, %c0_15] : memref<1x1x4x288xf32, #tpu.memory_space<vmem>>, vector<1x1x4x256xf32>
    %29 = vector.shape_cast %28 : vector<1x1x4x256xf32> to vector<4x256xf32>
    %c255_i32 = arith.constant 255 : i32
    %30 = tpu.dynamic_rotate %29 by %c255_i32 dim 1 : vector<4x256xf32>, i32 -> vector<4x256xf32>
    %c15_i32 = arith.constant 15 : i32
    %31 = vector.broadcast %c15_i32 : i32 to vector<1x256xi32>
    %32 = arith.cmpi slt, %16, %31 : vector<1x256xi32>
    %cst_16 = arith.constant 0.000000e+00 : f32
    %33 = vector.broadcast %cst_16 : f32 to vector<4x256xf32>
    %34 = vector.shape_cast %32 : vector<1x256xi1> to vector<1x256xi1>
    %35 = vector.broadcast %34 : vector<1x256xi1> to vector<4x256xi1>
    %36 = arith.select %35, %30, %33 : vector<4x256xi1>, vector<4x256xf32>
    %c0_17 = arith.constant 0 : index
    %c0_18 = arith.constant 0 : index
    %c0_19 = arith.constant 0 : index
    %c16 = arith.constant 16 : index
    %37 = vector.load %arg2[%c0_17, %c0_18, %c0_19, %c16] : memref<1x1x4x288xf32, #tpu.memory_space<vmem>>, vector<1x1x4x256xf32>
    %38 = vector.shape_cast %37 : vector<1x1x4x256xf32> to vector<4x256xf32>
    %c1_i32_20 = arith.constant 1 : i32
    %39 = tpu.dynamic_rotate %38 by %c1_i32_20 dim 1 : vector<4x256xf32>, i32 -> vector<4x256xf32>
    %c1_i32_21 = arith.constant 1 : i32
    %40 = vector.broadcast %c1_i32_21 : i32 to vector<1x256xi32>
    %41 = arith.cmpi sge, %16, %40 : vector<1x256xi32>
    %cst_22 = arith.constant 0.000000e+00 : f32
    %42 = vector.broadcast %cst_22 : f32 to vector<4x256xf32>
    %43 = vector.shape_cast %41 : vector<1x256xi1> to vector<1x256xi1>
    %44 = vector.broadcast %43 : vector<1x256xi1> to vector<4x256xi1>
    %45 = arith.select %44, %39, %42 : vector<4x256xi1>, vector<4x256xf32>
    %c0_23 = arith.constant 0 : index
    %c0_24 = arith.constant 0 : index
    %c0_25 = arith.constant 0 : index
    %c16_26 = arith.constant 16 : index
    %46 = vector.load %arg2[%c0_23, %c0_24, %c0_25, %c16_26] : memref<1x1x4x288xf32, #tpu.memory_space<vmem>>, vector<1x1x4x256xf32>
    %47 = vector.shape_cast %46 : vector<1x1x4x256xf32> to vector<4x256xf32>
    %c0_27 = arith.constant 0 : index
    %c0_28 = arith.constant 0 : index
    %c0_29 = arith.constant 0 : index
    %c16_30 = arith.constant 16 : index
    %48 = vector.load %arg2[%c0_27, %c0_28, %c0_29, %c16_30] : memref<1x1x4x288xf32, #tpu.memory_space<vmem>>, vector<1x1x4x256xf32>
    %49 = vector.shape_cast %48 : vector<1x1x4x256xf32> to vector<4x256xf32>
    %c255_i32_31 = arith.constant 255 : i32
    %50 = tpu.dynamic_rotate %49 by %c255_i32_31 dim 1 : vector<4x256xf32>, i32 -> vector<4x256xf32>
    %c15_i32_32 = arith.constant 15 : i32
    %51 = vector.broadcast %c15_i32_32 : i32 to vector<1x256xi32>
    %52 = arith.cmpi slt, %16, %51 : vector<1x256xi32>
    %cst_33 = arith.constant 0.000000e+00 : f32
    %53 = vector.broadcast %cst_33 : f32 to vector<4x256xf32>
    %54 = vector.shape_cast %52 : vector<1x256xi1> to vector<1x256xi1>
    %55 = vector.broadcast %54 : vector<1x256xi1> to vector<4x256xi1>
    %56 = arith.select %55, %50, %53 : vector<4x256xi1>, vector<4x256xf32>
    %c0_34 = arith.constant 0 : index
    %c0_35 = arith.constant 0 : index
    %c0_36 = arith.constant 0 : index
    %c32 = arith.constant 32 : index
    %57 = vector.load %arg2[%c0_34, %c0_35, %c0_36, %c32] : memref<1x1x4x288xf32, #tpu.memory_space<vmem>>, vector<1x1x4x256xf32>
    %58 = vector.shape_cast %57 : vector<1x1x4x256xf32> to vector<4x256xf32>
    %c1_i32_37 = arith.constant 1 : i32
    %59 = tpu.dynamic_rotate %58 by %c1_i32_37 dim 1 : vector<4x256xf32>, i32 -> vector<4x256xf32>
    %c1_i32_38 = arith.constant 1 : i32
    %60 = vector.broadcast %c1_i32_38 : i32 to vector<1x256xi32>
    %61 = arith.cmpi sge, %16, %60 : vector<1x256xi32>
    %cst_39 = arith.constant 0.000000e+00 : f32
    %62 = vector.broadcast %cst_39 : f32 to vector<4x256xf32>
    %63 = vector.shape_cast %61 : vector<1x256xi1> to vector<1x256xi1>
    %64 = vector.broadcast %63 : vector<1x256xi1> to vector<4x256xi1>
    %65 = arith.select %64, %59, %62 : vector<4x256xi1>, vector<4x256xf32>
    %c0_40 = arith.constant 0 : index
    %c0_41 = arith.constant 0 : index
    %c0_42 = arith.constant 0 : index
    %c32_43 = arith.constant 32 : index
    %66 = vector.load %arg2[%c0_40, %c0_41, %c0_42, %c32_43] : memref<1x1x4x288xf32, #tpu.memory_space<vmem>>, vector<1x1x4x256xf32>
    %67 = vector.shape_cast %66 : vector<1x1x4x256xf32> to vector<4x256xf32>
    %c0_44 = arith.constant 0 : index
    %c0_45 = arith.constant 0 : index
    %c0_46 = arith.constant 0 : index
    %c32_47 = arith.constant 32 : index
    %68 = vector.load %arg2[%c0_44, %c0_45, %c0_46, %c32_47] : memref<1x1x4x288xf32, #tpu.memory_space<vmem>>, vector<1x1x4x256xf32>
    %69 = vector.shape_cast %68 : vector<1x1x4x256xf32> to vector<4x256xf32>
    %c255_i32_48 = arith.constant 255 : i32
    %70 = tpu.dynamic_rotate %69 by %c255_i32_48 dim 1 : vector<4x256xf32>, i32 -> vector<4x256xf32>
    %c15_i32_49 = arith.constant 15 : i32
    %71 = vector.broadcast %c15_i32_49 : i32 to vector<1x256xi32>
    %72 = arith.cmpi slt, %16, %71 : vector<1x256xi32>
    %cst_50 = arith.constant 0.000000e+00 : f32
    %73 = vector.broadcast %cst_50 : f32 to vector<4x256xf32>
    %74 = vector.shape_cast %72 : vector<1x256xi1> to vector<1x256xi1>
    %75 = vector.broadcast %74 : vector<1x256xi1> to vector<4x256xi1>
    %76 = arith.select %75, %70, %73 : vector<4x256xi1>, vector<4x256xf32>
    %77 = tpu.concatenate %25, %27, %36, %45, %47, %56, %65, %67, %76 in 0 : vector<4x256xf32>, vector<4x256xf32>, vector<4x256xf32>, vector<4x256xf32>, vector<4x256xf32>, vector<4x256xf32>, vector<4x256xf32>, vector<4x256xf32>, vector<4x256xf32> -> vector<36x256xf32>
    %c0_51 = arith.constant 0 : index
    %c0_52 = arith.constant 0 : index
    %78 = vector.load %arg3[%c0_51, %c0_52] : memref<8x36xf32, #tpu.memory_space<vmem>>, vector<8x36xf32>
    %cst_53 = arith.constant dense<0.000000e+00> : vector<8x256xf32>
    %79 = tpu.matmul %78, %77, %cst_53 {dimension_numbers = #tpu.dot_dimension_numbers<[1], [0], [0], [1], [0, 0, 1, 1], [], []>} : vector<8x36xf32>, vector<36x256xf32>, vector<8x256xf32> -> vector<8x256xf32>
    %c0_54 = arith.constant 0 : index
    %c0_55 = arith.constant 0 : index
    %80 = vector.load %arg4[%c0_54, %c0_55] : memref<8x1xf32, #tpu.memory_space<vmem>>, vector<8x1xf32>
    %81 = vector.broadcast %80 : vector<8x1xf32> to vector<8x256xf32>
    %82 = arith.addf %79, %81 : vector<8x256xf32>
    %83 = arith.mulf %82, %82 : vector<8x256xf32>
    %cst_56 = arith.constant dense<0.000000e+00> : vector<256xf32>
    %84 = vector.multi_reduction <add>, %83, %cst_56 [0] : vector<8x256xf32> to vector<256xf32>
    %85 = vector.shape_cast %84 : vector<256xf32> to vector<1x256xf32>
    %cst_57 = arith.constant 8.000000e+00 : f32
    %86 = vector.broadcast %cst_57 : f32 to vector<1x256xf32>
    %87 = arith.divf %85, %86 : vector<1x256xf32>
    %cst_58 = arith.constant 9.99999993E-9 : f32
    %88 = vector.broadcast %cst_58 : f32 to vector<1x256xf32>
    %89 = arith.addf %87, %88 : vector<1x256xf32>
    %90 = math.rsqrt %89 : vector<1x256xf32>
    %91 = vector.broadcast %90 : vector<1x256xf32> to vector<8x256xf32>
    %92 = arith.mulf %82, %91 : vector<8x256xf32>
    %cst_59 = arith.constant 0.000000e+00 : f32
    %93 = vector.broadcast %cst_59 : f32 to vector<8x256xf32>
    %94 = arith.cmpf oge, %92, %93 : vector<8x256xf32>
    %cst_60 = arith.constant 2.000000e-01 : f32
    %95 = vector.broadcast %cst_60 : f32 to vector<8x256xf32>
    %96 = arith.mulf %95, %92 : vector<8x256xf32>
    %97 = arith.select %94, %92, %96 : vector<8x256xi1>, vector<8x256xf32>
    %c0_61 = arith.constant 0 : index
    %c0_62 = arith.constant 0 : index
    %c0_63 = arith.constant 0 : index
    %98 = vector.load %arg5[%c0_61, %c0_62, %c0_63] : memref<1x8x256xf32, #tpu.memory_space<vmem>>, vector<1x8x256xf32>
    %99 = vector.shape_cast %98 : vector<1x8x256xf32> to vector<8x256xf32>
    %100 = vector.shape_cast %97 : vector<8x256xf32> to vector<1x8x256xf32>
    tpu.vector_store %arg5[%c0_61, %c0_62, %c0_63], %100 {strides = array<i32>} : memref<1x8x256xf32, #tpu.memory_space<vmem>>, vector<1x8x256xf32>,
    return
  }
  func.func @transform_0(%arg0: i32, %arg1: i32) -> (i32, i32, i32, i32) {
    %c0_i32 = arith.constant 0 : i32
    %c0_i32_0 = arith.constant 0 : i32
    %c0_i32_1 = arith.constant 0 : i32
    return %arg0, %arg1, %c0_i32, %c0_i32_0 : i32, i32, i32, i32
  }
  func.func @transform_1(%arg0: i32, %arg1: i32) -> (i32, i32) {
    %c0_i32 = arith.constant 0 : i32
    %c0_i32_0 = arith.constant 0 : i32
    %c0_i32_1 = arith.constant 0 : i32
    return %c0_i32, %c0_i32_0 : i32, i32
  }
  func.func @transform_2(%arg0: i32, %arg1: i32) -> (i32, i32) {
    %c0_i32 = arith.constant 0 : i32
    %c0_i32_0 = arith.constant 0 : i32
    %c0_i32_1 = arith.constant 0 : i32
    return %c0_i32, %c0_i32_0 : i32, i32
  }
  func.func @transform_3(%arg0: i32, %arg1: i32) -> (i32, i32, i32) {
    %c0_i32 = arith.constant 0 : i32
    %c0_i32_0 = arith.constant 0 : i32
    return %arg0, %c0_i32, %arg1 : i32, i32, i32
  }
}

</mosaic_0001>

<llo_original>
// kernel: tpu_custom_call.1
$region0: #{tpu_custom_call.1}
  #allocation0 [shape = 'u32[]', space=smem, size = 0x4, offset = 0x4, fixed_abs, tag = 'smem constant byte address 0x4 - core index']
  #allocation1 [shape = 'u32[144,128]{1,0:T(1,128)}', space=vmem, size = 0x12000, scoped, tag = 'internal scratch']
  %s0 = inlined_call_operand.hbm [shape: f32[2,1,4,288], index: 0, kind: input, shape index: {}]
  %s1 = inlined_call_operand.vmem [shape: f32[8,36], index: 1, kind: input, shape index: {}]
  %s2 = inlined_call_operand.vmem [shape: f32[8,1], index: 2, kind: input, shape index: {}]
  %s3 = inlined_call_operand.hbm [shape: f32[2,8,256], index: 3, kind: output, shape index: {}]
  %s4 = sld [smem:[#allocation0]]
  $region49: #{tpu_custom_call.1} parent=0
    _
  %s6 = ssub.s32 1, %s4
  %s7 = scalar_select 0, %s6, %s4
  $region1: #{tpu_custom_call.1} parent=0
    #allocation2 [shape = 'u8[12288]{0}', space=vmem, size = 0x3000, scoped, tag = 'input window, operand 0']
    #allocation3 [shape = 's32[2]{0}', space=sflag, size = 0x8, scoped, tag = 'scoped memory for tpu_custom_call.1']
    #allocation4 [shape = 's32[2]{0}', space=sflag, size = 0x8, scoped, tag = 'scoped memory for tpu_custom_call.1']
    #allocation5 [shape = 'u8[16384]{0}', space=vmem, size = 0x4000, scoped, tag = 'output window, operand 0']
    %8 = vsyncpa [#allocation3], 0
    %s9 = scalar_lea.sflag [#allocation3], 1
    %10 = vsyncpa %s9, 0
    %11 = vsyncpa [#allocation4], 0
    %s12 = scalar_lea.sflag [#allocation4], 1
    %13 = vsyncpa %s12, 0
    loop: start=0, step=1, limit=4
    $region2: #{tpu_custom_call.1} parent=1 // loop_pre_header
      _
    $region3: #{tpu_custom_call.1} parent=1 // loop_header
      %s15 = sphi 0, %s19
      %p16 = scmp.ge.s32.totalorder %s15, 4
      %s22 = sphi 0, %s34
      %s23 = sphi 0, %s30
      %s24 = sphi 0, %s22
      %s25 = sphi 0, %s23
      %s26 = sphi 0, %s24
      %s27 = sphi 0, %s25
      %s39 = sphi 0, %s41
      %s42 = sphi 0, %s39
      %s43 = sphi 0, %s42
      %s59 = sphi 0, %s43
      %s63 = sphi 0, %s63
      %s65 = sphi 0, %s63
      %s66 = sphi 0, %s65
      %s80 = sphi 0, %s66
      %s84 = sphi 0, %s84
      %s86 = sphi 0, %s84
      %s87 = sphi 0, %s86
      %s101 = sphi 0, %s87
      %s109 = sphi 0, %s111
      %s112 = sphi 0, %s109
      %s113 = sphi 0, %s112
      %s129 = sphi 0, %s113
    $region4: #{tpu_custom_call.1} parent=1 // loop_header_branch
      %18 = sbr.rel (%p16) target = $region8
    $region5: #{tpu_custom_call.1} parent=1 // loop_body
      %s20 = ssub.s32 %s15, 1
      %s21 = ssub.s32 %s15, 2
      %s28 = sadd.s32 1, %s23
      %p29 = scmp.ge.s32.totalorder %s28, 1
      %s30 = scalar_select %p29, 0, %s28
      %s31 = sadd.s32 1, %s22
      %s32 = scalar_select %p29, %s31, %s22
      %p33 = scmp.ge.s32.totalorder %s32, 2
      %s34 = scalar_select %p33, 0, %s32
      %s35 = ssub.s32 %s22, %s34
      %s36 = ssub.s32 %s23, %s30
      %s37 = sor.u32 %s35, %s36
      %p38 = scmp.eq.s32.totalorder %s37, 0
      %s40 = sadd.s32 %s39, 1
      %s41 = scalar_select %p38, %s39, %s40
      %p44 = pneg %p38
      %p45 = scmp.eq.s32.totalorder %s15, 1
      %p46 = por %p44, %p45
      %p47 = scmp.ne.s32.totalorder %s39, %s42
      %p48 = scmp.eq.s32.totalorder %s15, 0
      %p49 = por %p47, %p48
      %p50 = scmp.ne.s32.totalorder %s39, %s42
      %p51 = scmp.eq.s32.totalorder %s20, 1
      %p52 = por %p50, %p51
      %p53 = scmp.ne.s32.totalorder %s42, %s43
      %p54 = scmp.eq.s32.totalorder %s20, 0
      %p55 = por %p53, %p54
      %p56 = scmp.ne.s32.totalorder %s42, %s43
      %p57 = scmp.eq.s32.totalorder %s21, 1
      %p58 = por %p56, %p57
      %p60 = scmp.ne.s32.totalorder %s43, %s59
      %p61 = scmp.eq.s32.totalorder %s21, 0
      %p62 = por %p60, %p61
      %s64 = sadd.s32 %s63, 1
      %p67 = scmp.eq.s32.totalorder %s15, 1
      %p68 = scmp.ne.s32.totalorder %s63, %s65
      %p69 = scmp.eq.s32.totalorder %s15, 0
      %p70 = por %p68, %p69
      %p71 = scmp.ne.s32.totalorder %s63, %s65
      %p72 = scmp.eq.s32.totalorder %s20, 1
      %p73 = por %p71, %p72
      %p74 = scmp.ne.s32.totalorder %s65, %s66
      %p75 = scmp.eq.s32.totalorder %s20, 0
      %p76 = por %p74, %p75
      %p77 = scmp.ne.s32.totalorder %s65, %s66
      %p78 = scmp.eq.s32.totalorder %s21, 1
      %p79 = por %p77, %p78
      %p81 = scmp.ne.s32.totalorder %s66, %s80
      %p82 = scmp.eq.s32.totalorder %s21, 0
      %p83 = por %p81, %p82
      %s85 = sadd.s32 %s84, 1
      %p88 = scmp.eq.s32.totalorder %s15, 1
      %p89 = scmp.ne.s32.totalorder %s84, %s86
      %p90 = scmp.eq.s32.totalorder %s15, 0
      %p91 = por %p89, %p90
      %p92 = scmp.ne.s32.totalorder %s84, %s86
      %p93 = scmp.eq.s32.totalorder %s20, 1
      %p94 = por %p92, %p93
      %p95 = scmp.ne.s32.totalorder %s86, %s87
      %p96 = scmp.eq.s32.totalorder %s20, 0
      %p97 = por %p95, %p96
      %p98 = scmp.ne.s32.totalorder %s86, %s87
      %p99 = scmp.eq.s32.totalorder %s21, 1
      %p100 = por %p98, %p99
      %p102 = scmp.ne.s32.totalorder %s87, %s101
      %p103 = scmp.eq.s32.totalorder %s21, 0
      %p104 = por %p102, %p103
      %s105 = ssub.s32 %s22, %s34
      %s106 = ssub.s32 %s23, %s30
      %s107 = sor.u32 %s105, %s106
      %p108 = scmp.eq.s32.totalorder %s107, 0
      %s110 = sadd.s32 %s109, 1
      %s111 = scalar_select %p108, %s109, %s110
      %p114 = pneg %p108
      %p115 = scmp.eq.s32.totalorder %s15, 1
      %p116 = por %p114, %p115
      %p117 = scmp.ne.s32.totalorder %s109, %s112
      %p118 = scmp.eq.s32.totalorder %s15, 0
      %p119 = por %p117, %p118
      %p120 = scmp.ne.s32.totalorder %s109, %s112
      %p121 = scmp.eq.s32.totalorder %s20, 1
      %p122 = por %p120, %p121
      %p123 = scmp.ne.s32.totalorder %s112, %s113
      %p124 = scmp.eq.s32.totalorder %s20, 0
      %p125 = por %p123, %p124
      %p126 = scmp.ne.s32.totalorder %s112, %s113
      %p127 = scmp.eq.s32.totalorder %s21, 1
      %p128 = por %p126, %p127
      %p130 = scmp.ne.s32.totalorder %s113, %s129
      %p131 = scmp.eq.s32.totalorder %s21, 0
      %p132 = por %p130, %p131
      %p133 = scmp.le.s32.totalorder 1, %s15
      %p134 = scmp.lt.s32.totalorder %s15, 3
      %p135 = pnand %p133, %p134
      %p136 = pneg %p135
      // Predicated region
      $region9: #{tpu_custom_call.1} parent=5 // pred_check
        _
      $region10: #{tpu_custom_call.1} parent=5 // pred_check_branch
        %138 = sbr.rel (%p135) target = $region12
      $region11: #{tpu_custom_call.1} parent=5 // pred_region
        %s139 = ssub.s32 %s15, 1
        // Predicated region
        $region13: #{tpu_custom_call.1} parent=11 // pred_check
          %p140 = pneg %p76
        $region14: #{tpu_custom_call.1} parent=11 // pred_check_branch
          %142 = sbr.rel (%p140) target = $region16
        $region15: #{tpu_custom_call.1} parent=11 // pred_region
          _
        $region16: #{tpu_custom_call.1} parent=11 // pred_fallthru
          _
        // Predicated region
        $region17: #{tpu_custom_call.1} parent=11 // pred_check
          %p143 = pneg %p97
        $region18: #{tpu_custom_call.1} parent=11 // pred_check_branch
          %145 = sbr.rel (%p143) target = $region20
        $region19: #{tpu_custom_call.1} parent=11 // pred_region
          _
        $region20: #{tpu_custom_call.1} parent=11 // pred_fallthru
          _
      $region12: #{tpu_custom_call.1} parent=5 // pred_fallthru
        _
      %p146 = scmp.lt.s32.totalorder %s15, 2
      // Predicated region
      $region21: #{tpu_custom_call.1} parent=5 // pred_check
        %p147 = pneg %p146
      $region22: #{tpu_custom_call.1} parent=5 // pred_check_branch
        %149 = sbr.rel (%p147) target = $region24
      $region23: #{tpu_custom_call.1} parent=5 // pred_region
        // Predicated region
        $region25: #{tpu_custom_call.1} parent=23 // pred_check
          %p150 = pneg %p49
        $region26: #{tpu_custom_call.1} parent=23 // pred_check_branch
          %152 = sbr.rel (%p150) target = $region28
        $region27: #{tpu_custom_call.1} parent=23 // pred_region
          %s153 = sand.u32 %s39, 1
          %s154 = scalar_lea.sflag [#allocation3], %s153
          %s155 = sand.u32 %s39, 1
          %s156 = smul.addr %s155, 12
          %s157 = scalar_lea.vmem [#allocation2], %s156
          %s159 = ssub.s32 192, 192
          %160 = vsyncadd %s154, %s159
          %s161 = smul.addr %s23, 3
          %s162 = smul.addr %s22, 3
          %s163 = sadd.s32 %s161, %s162
          %s164 = smul.addr %s163, 64
          %s165 = scalar_lea.hbm %s0, %s164
          %s167 = sshll.u32 %s157, 4
          %s168 = int_to_ptr.vmem [resolvable:$true] %s167
          %170 = dma.hbm_to_vmem [thread:$0]  %s165, 192, %s168, %s154
        $region28: #{tpu_custom_call.1} parent=23 // pred_fallthru
          _
      $region24: #{tpu_custom_call.1} parent=5 // pred_fallthru
        _
      %p171 = scmp.le.s32.totalorder 1, %s15
      %p172 = scmp.lt.s32.totalorder %s15, 3
      %p173 = pnand %p171, %p172
      %p174 = pneg %p173
      // Predicated region
      $region29: #{tpu_custom_call.1} parent=5 // pred_check
        _
      $region30: #{tpu_custom_call.1} parent=5 // pred_check_branch
        %176 = sbr.rel (%p173) target = $region32
      $region31: #{tpu_custom_call.1} parent=5 // pred_region
        %s177 = ssub.s32 %s15, 1
        %s178 = sand.u32 %s42, 1
        %s179 = scalar_lea.sflag [#allocation3], %s178
        %s180 = sand.u32 %s42, 1
        %s181 = smul.addr %s180, 12
        %s182 = scalar_lea.vmem [#allocation2], %s181
        // Predicated region
        $region33: #{tpu_custom_call.1} parent=31 // pred_check
          %p183 = pneg %p55
        $region34: #{tpu_custom_call.1} parent=31 // pred_check_branch
          %185 = sbr.rel (%p183) target = $region36
        $region35: #{tpu_custom_call.1} parent=31 // pred_region
          %186 = dma.done %s179, 192
        $region36: #{tpu_custom_call.1} parent=31 // pred_fallthru
          _
        %s187 = sand.u32 %s42, 1
        %s188 = scalar_lea.sflag [#allocation3], %s187
        %s189 = sand.u32 %s42, 1
        %s190 = smul.addr %s189, 12
        %s191 = scalar_lea.vmem [#allocation2], %s190
        %p192 = pneg %p55
        %p193 = pneg %p52
        %p194 = pneg %p76
        %p195 = pneg %p73
        %p196 = pneg %p97
        %p197 = pneg %p94
        %p198 = pneg %p125
        %p199 = pneg %p122
        %s200 = sand.u32 %s112, 1
        %s201 = scalar_lea.sflag [#allocation4], %s200
        %s202 = sand.u32 %s112, 1
        %s203 = smul.addr %s202, 16
        %s204 = scalar_lea.vmem [#allocation5], %s203
        %s205 = smul.u32 2, %s25
        %v206 = vlaneseq
        %v207 = vand.u32 %v206, 127
        %v208 = vadd.s32 %v207, 128
        %vm209 = vcmp.lt.s32.totalorder %v207, 0
        %v210 = vsub.s32 0, %v207
        %v211 = vsel %vm209, %v210, %v207
        %v212 = vshrl.u32 %v211, 4
        %v213 = vand.u32 %v211, 15
        %v214 = vsub.s32 0, %v213
        %v215 = vsel %vm209, %v214, %v213
        %vm216 = vcmp.lt.s32.totalorder %v208, 0
        %v217 = vsub.s32 0, %v208
        %v218 = vsel %vm216, %v217, %v208
        %v219 = vshrl.u32 %v218, 4
        %v220 = vand.u32 %v218, 15
        %v221 = vsub.s32 0, %v220
        %v222 = vsel %vm216, %v221, %v220
        %vm223 = vcmp.ne.s32.totalorder %v215, 0
        %vm224 = vcmp.ne.s32.totalorder %v222, 0
        %vm225 = vcmp.lt.s32.totalorder %v215, 0
        %vm226 = vcmp.lt.s32.totalorder %v222, 0
        %vm227 = vmand %vm225, %vm223
        %vm228 = vmand %vm226, %vm224
        %v229 = vadd.s32 %v215, 16
        %v230 = vadd.s32 %v222, 16
        %v231 = vsel %vm227, %v229, %v215
        %v232 = vsel %vm228, %v230, %v222
        %v233 = vld [vmem:[%s182] sm:$0xff]
        %v235 = vcombine.high %v233, %v233
        %237 = vrot.lane.b32.xlu0 %v233, 1
        %v238 = vpop.permute.xlu0 %237
        %239 = vrot.lane.b32.xlu0 %v235, 1
        %v240 = vpop.permute.xlu0 %239
        %vm241 = vcmp.lt.s32.totalorder %v207, 1
        %v242 = vsel %vm241, %v238, %v240
        %v243 = vsel %vm241, %v240, %v238
        %vm244 = vcmp.ge.s32.totalorder %v231, 1
        %vm245 = vcmp.ge.s32.totalorder %v232, 1
        %v246 = vsel %vm244, 1, 0
        %v247 = vsel %vm245, 1, 0
        %vm248 = vcmp.eq.s32.totalorder %v246, 1
        %vm249 = vcmp.eq.s32.totalorder %v247, 1
        %v250 = vsel %vm248, %v243, 0.0
        %v251 = vsel %vm249, %v242, 0.0
        %252 = vrot.lane.b32.xlu0 %v233, 127
        %v253 = vpop.permute.xlu0 %252
        %254 = vrot.lane.b32.xlu0 %v235, 127
        %v255 = vpop.permute.xlu0 %254
        %vm256 = vcmp.lt.s32.totalorder %v207, 127
        %v257 = vsel %vm256, %v253, %v255
        %v258 = vsel %vm256, %v255, %v253
        %vm259 = vcmp.lt.s32.totalorder %v231, 15
        %vm260 = vcmp.lt.s32.totalorder %v232, 15
        %v261 = vsel %vm259, 1, 0
        %v262 = vsel %vm260, 1, 0
        %vm263 = vcmp.eq.s32.totalorder %v261, 1
        %vm264 = vcmp.eq.s32.totalorder %v262, 1
        %v265 = vsel %vm263, %v257, 0.0
        %v266 = vsel %vm264, %v258, 0.0
        %v267 = vld [vmem:[%s182 + $0x8] sm:$0xf]
        %269 = vrot.lane.b32.xlu0 %v233, 112
        %v270 = vpop.permute.xlu0 %269
        %271 = vrot.lane.b32.xlu0 %v235, 112
        %v272 = vpop.permute.xlu0 %271
        %273 = vrot.lane.b32.xlu0 %v267, 112
        %v274 = vpop.permute.xlu0 %273
        %vm275 = vcmask 916480
        %v276 = vsel %vm275, %v270, %v272
        %v277 = vsel %vm275, %v272, %v274
        %280 = vrot.lane.b32.xlu0 %v276, 1
        %v281 = vpop.permute.xlu0 %280
        %282 = vrot.lane.b32.xlu0 %v277, 1
        %v283 = vpop.permute.xlu0 %282
        %v284 = vsel %vm241, %v281, %v283
        %v285 = vsel %vm241, %v283, %v281
        %v286 = vsel %vm248, %v285, 0.0
        %v287 = vsel %vm249, %v284, 0.0
        %288 = vrot.lane.b32.xlu0 %v276, 127
        %v289 = vpop.permute.xlu0 %288
        %290 = vrot.lane.b32.xlu0 %v277, 127
        %v291 = vpop.permute.xlu0 %290
        %v292 = vsel %vm256, %v289, %v291
        %v293 = vsel %vm256, %v291, %v289
        %v294 = vsel %vm263, %v292, 0.0
        %v295 = vsel %vm264, %v293, 0.0
        %296 = vrot.lane.b32.xlu0 %v233, 96
        %v297 = vpop.permute.xlu0 %296
        %298 = vrot.lane.b32.xlu0 %v235, 96
        %v299 = vpop.permute.xlu0 %298
        %300 = vrot.lane.b32.xlu0 %v267, 96
        %v301 = vpop.permute.xlu0 %300
        %vm302 = vcmask 785408
        %v303 = vsel %vm302, %v297, %v299
        %v304 = vsel %vm302, %v299, %v301
        %307 = vrot.lane.b32.xlu0 %v303, 1
        %v308 = vpop.permute.xlu0 %307
        %309 = vrot.lane.b32.xlu0 %v304, 1
        %v310 = vpop.permute.xlu0 %309
        %v311 = vsel %vm241, %v308, %v310
        %v312 = vsel %vm241, %v310, %v308
        %v313 = vsel %vm248, %v312, 0.0
        %v314 = vsel %vm249, %v311, 0.0
        %315 = vrot.lane.b32.xlu0 %v303, 127
        %v316 = vpop.permute.xlu0 %315
        %317 = vrot.lane.b32.xlu0 %v304, 127
        %v318 = vpop.permute.xlu0 %317
        %v319 = vsel %vm256, %v316, %v318
        %v320 = vsel %vm256, %v318, %v316
        %v321 = vsel %vm263, %v319, 0.0
        %v322 = vsel %vm264, %v320, 0.0
        %v323 = vcombine.low %v233, %v233
        %v327 = vrot.slane %v286, 4
        %v328 = vrot.slane %v287, 4
        %v333 = vrot.slane %v294, 4
        %v334 = vrot.slane %v295, 4
        %v337 = vcombine.low %v267, %v267
        %338 = vrot.lane.b32.xlu0 %v323, 96
        %v339 = vpop.permute.xlu0 %338
        %340 = vrot.lane.b32.xlu0 %v337, 96
        %v341 = vpop.permute.xlu0 %340
        %v342 = vsel %vm302, %v339, %v297
        %v343 = vsel %vm302, %v297, %v341
        %vm346 = vcmask 1043456
        %v347 = vsel %vm346, %v250, %v323
        %v348 = vsel %vm346, %v251, %v233
        %v349 = vsel %vm346, %v265, %v327
        %v350 = vsel %vm346, %v266, %v328
        %v351 = vsel %vm346, %v276, %v333
        %v352 = vsel %vm346, %v277, %v334
        %v353 = vsel %vm346, %v313, %v342
        %v354 = vsel %vm346, %v314, %v343
        %v355 = vld [vmem:[%s1] sm:$0xff]
        %v356 = vld [vmem:[%s2] sm:$0xff]
        %358 = vset.pattern.permute.xlu0 0
        %359 = vperm.xlu0 %358, %v356
        %v360 = vpop.permute.xlu0 %359
        %vm362 = vcmask 293888
        %v364 = vsel %vm362, %v355, 0
        %v367 = vsel %vm346, %v321, 0
        %v370 = vsel %vm346, %v322, 0
        %372 = vmatprep.subr.mxu0 %v348
        %373 = vmatpush1.msra.mxu0 %v347
        %374 = vmatprep.subr.mxu0 %v350
        %375 = vmatpush1.msra.mxu0 %v349
        %376 = vmatprep.subr.mxu0 %v352
        %377 = vmatpush1.msra.mxu0 %v351
        %378 = vmatprep.subr.mxu0 %v354
        %379 = vmatpush1.msra.mxu0 %v353
        %380 = vmatprep.subr.mxu0 %v370
        %381 = vmatpush1.msra.mxu0 %v367
        %382 = vmatprep.subr.mxu0 0.0
        %383 = vmatpush1.msra.mxu0 0.0
        %384 = vmatprep.subr.mxu0 0.0
        %385 = vmatpush1.msra.mxu0 0.0
        %386 = vmatprep.subr.mxu0 0.0
        %387 = vmatpush1.msra.mxu0 0.0
        %388 = vmatprep.subr.mxu0 0.0
        %389 = vmatpush1.msra.mxu0 0.0
        %390 = vmatprep.subr.mxu0 0.0
        %391 = vmatpush1.msra.mxu0 0.0
        %392 = vmatprep.subr.mxu0 0.0
        %393 = vmatpush1.msra.mxu0 0.0
        %394 = vmatprep.subr.mxu0 0.0
        %395 = vmatpush1.msra.mxu0 0.0
        %396 = vmatprep.subr.mxu0 0.0
        %397 = vmatpush1.msra.mxu0 0.0
        %398 = vmatprep.subr.mxu0 0.0
        %399 = vmatpush1.msra.mxu0 0.0
        %400 = vmatprep.subr.mxu0 0.0
        %401 = vmatpush1.msra.mxu0 0.0
        %402 = vmatprep.subr.mxu0 0.0
        %403 = vmatpush1.msra.mxu0 0.0
        %404 = vmatprep.subr.mxu0 0.0
        %405 = vmatpush1.msra.mxu0 0.0
        %406 = vmatprep.subr.mxu0 0.0
        %407 = vmatpush1.msra.mxu0 0.0
        %408 = vmatprep.subr.mxu0 0.0
        %409 = vmatpush1.msra.mxu0 0.0
        %410 = vmatprep.subr.mxu0 0.0
        %411 = vmatpush1.msra.mxu0 0.0
        %412 = vmatprep.subr.mxu0 0.0
        %413 = vmatpush1.msra.mxu0 0.0
        %414 = vmatprep.subr.mxu0 0.0
        %415 = vmatpush1.msra.mxu0 0.0
        %416 = vmatprep.subr.mxu0 0.0
        %417 = vmatpush1.msra.mxu0 0.0
        %418 = vmatprep.subr.mxu0 0.0
        %419 = vmatpush1.msra.mxu0 0.0
        %420 = vmatprep.subr.mxu0 0.0
        %421 = vmatpush1.msra.mxu0 0.0
        %422 = vmatprep.subr.mxu0 0.0
        %423 = vmatpush1.msra.mxu0 0.0
        %424 = vmatprep.subr.mxu0 0.0
        %425 = vmatpush1.msra.mxu0 0.0
        %426 = vmatprep.subr.mxu0 0.0
        %427 = vmatpush1.msra.mxu0 0.0
        %428 = vmatprep.subr.mxu0 0.0
        %429 = vmatpush1.msra.mxu0 0.0
        %430 = vmatprep.subr.mxu0 0.0
        %431 = vmatpush1.msra.mxu0 0.0
        %432 = vmatprep.subr.mxu0 0.0
        %433 = vmatpush1.msra.mxu0 0.0
        %434 = vmatprep.subr.mxu0 0.0
        %435 = vmatpush1.msra.mxu0 0.0
        %436 = vmatprep.mubr.f32.mxu0 0.0
        %437 = vmatmul.mubr.f32.gmra.mrb[0].mxu0 %v364
        %v438 = vpop.f32.mrb[0].mxu0
        %v439 = vadd.f32 %v360, %v438
        %v440 = vpop.f32.mrb[0].mxu0
        %v441 = vadd.f32 %v360, %v440
        %442 = vdwg.mxu0
        %v443 = vmul.f32 %v439, %v439
        %v444 = vmul.f32 %v441, %v441
        %v445 = vrot.slane %v443, 4
        %v446 = vadd.f32 %v443, %v445
        %v447 = vrot.slane %v446, 2
        %v448 = vadd.f32 %v446, %v447
        %v449 = vrot.slane %v448, 1
        %v450 = vadd.f32 %v448, %v449
        %v451 = vrot.slane %v444, 4
        %v452 = vadd.f32 %v444, %v451
        %v453 = vrot.slane %v452, 2
        %v454 = vadd.f32 %v452, %v453
        %v455 = vrot.slane %v454, 1
        %v456 = vadd.f32 %v454, %v455
        %v457 = vrcp.pop 8.0
        %v458 = vmul.f32 %v450, %v457
        %v459 = vmul.f32 %v456, %v457
        %v460 = vadd.f32 %v458, 1e-08
        %v461 = vadd.f32 %v459, 1e-08
        %v462 = vrsqrt.pop %v460
        %v463 = vrsqrt.pop %v461
        %v464 = vmul.f32 %v439, %v462
        %v465 = vmul.f32 %v441, %v463
        %vm466 = vcmp.ge.f32.partialorder %v464, 0.0
        %vm467 = vcmp.ge.f32.partialorder %v465, 0.0
        %v468 = vmul.f32 %v464, 0.2
        %v469 = vmul.f32 %v465, 0.2
        %v470 = vsel %vm466, %v464, %v468
        %v471 = vsel %vm467, %v465, %v469
        %472 = vst [vmem:[%s204] sm:$0xff] %v470
        %473 = vst [vmem:[%s204 + $0x8] sm:$0xff] %v471
        %s474 = sand.u32 %s112, 1
        %s475 = scalar_lea.sflag [#allocation4], %s474
        %s476 = sand.u32 %s112, 1
        %s477 = smul.addr %s476, 16
        %s478 = scalar_lea.vmem [#allocation5], %s477
        // Predicated region
        $region37: #{tpu_custom_call.1} parent=31 // pred_check
          %p479 = pneg %p122
        $region38: #{tpu_custom_call.1} parent=31 // pred_check_branch
          %481 = sbr.rel (%p479) target = $region40
        $region39: #{tpu_custom_call.1} parent=31 // pred_region
          %s482 = smul.u32 2, %s25
          %s484 = ssub.s32 256, 256
          %485 = vsyncadd %s475, %s484
          %s486 = smul.addr %s24, 2
          %s487 = sadd.s32 %s482, %s486
          %s488 = smul.addr %s487, 128
          %s489 = scalar_lea.hbm %s3, %s488
          %s491 = sshll.u32 %s478, 4
          %s492 = int_to_ptr.vmem [resolvable:$true] %s491
          %494 = dma.vmem_to_hbm [thread:$0]  %s492, 256, %s489, %s475
        $region40: #{tpu_custom_call.1} parent=31 // pred_fallthru
          _
      $region32: #{tpu_custom_call.1} parent=5 // pred_fallthru
        _
      %p495 = scmp.le.s32.totalorder 2, %s15
      // Predicated region
      $region41: #{tpu_custom_call.1} parent=5 // pred_check
        %p496 = pneg %p495
      $region42: #{tpu_custom_call.1} parent=5 // pred_check_branch
        %498 = sbr.rel (%p496) target = $region44
      $region43: #{tpu_custom_call.1} parent=5 // pred_region
        %s499 = ssub.s32 %s15, 2
        // Predicated region
        $region45: #{tpu_custom_call.1} parent=43 // pred_check
          %p500 = pneg %p128
        $region46: #{tpu_custom_call.1} parent=43 // pred_check_branch
          %502 = sbr.rel (%p500) target = $region48
        $region47: #{tpu_custom_call.1} parent=43 // pred_region
          %s503 = sand.u32 %s113, 1
          %s504 = scalar_lea.sflag [#allocation4], %s503
          %s505 = sand.u32 %s113, 1
          %s506 = smul.addr %s505, 16
          %s507 = scalar_lea.vmem [#allocation5], %s506
          %508 = dma.done %s504, 256
        $region48: #{tpu_custom_call.1} parent=43 // pred_fallthru
          _
      $region44: #{tpu_custom_call.1} parent=5 // pred_fallthru
        _
    $region6: #{tpu_custom_call.1} parent=1 // loop_footer
      %s19 = sadd.s32 1, %s15
    $region7: #{tpu_custom_call.1} parent=1 // loop_footer_branch
      %14 = sbr.rel target = $region3
    $region8: #{tpu_custom_call.1} parent=1 // loop_exit
      _
    %509 = vsyncpa [#allocation3], 1
    %s510 = scalar_lea.sflag [#allocation3], 1
    %511 = vsyncpa %s510, 1
    %512 = vsyncpa [#allocation4], 1
    %s513 = scalar_lea.sflag [#allocation4], 1
    %514 = vsyncpa %s513, 1

</llo_original>
